<compile_context>
chip_gen: v5e
topology: v5e:2x2
jax: 0.10.0
libtpu: 0.0.40
codegen_flags: <defaults>
</compile_context>

<pallas_src>
import jax
import jax.numpy as jnp
from jax.experimental import pallas as pl
from jax.experimental.pallas import tpu as pltpu


def _round_up(x: int, m: int) -> int:
    return (x + m - 1) // m * m


def _fused_linear_kernel(x_ref, w_ref, b_ref, out_ref):
    # Single MXU pass per batch tile: out = x @ W_fused + b_fused (all f32, in VMEM).
    out_ref[...] = (
        jnp.dot(x_ref[...], w_ref[...], preferred_element_type=jnp.float32)
        + b_ref[...]
    ).astype(out_ref.dtype)


def fashion_mnist_model_v0(x_nchw, w1, b1, w2, b2, *, batch_tile=128):
    """Forward pass of FashionMNISTModelV0.

    x_nchw: (B, C, H, W) float32
    w1:     (input_shape, hidden_units)   -- transposed vs. torch's (out, in)
    b1:     (hidden_units,)
    w2:     (hidden_units, output_shape)
    b2:     (output_shape,)
    returns (B, output_shape) float32
    """
    B = x_nchw.shape[0]
    D = x_nchw.shape[1] * x_nchw.shape[2] * x_nchw.shape[3]
    O = w2.shape[1]

    # nn.Flatten(): glue reshape in plain JAX.
    x = x_nchw.reshape(B, D).astype(jnp.float32)

    # Exact fusion of the two Linears (valid because there is NO activation between
    # them): W_fused = W1 @ W2  (D, O), b_fused = b1 @ W2 + b2  (O,).
    w1f = w1.astype(jnp.float32)
    w2f = w2.astype(jnp.float32)
    w_fused = jnp.dot(w1f, w2f, preferred_element_type=jnp.float32)          # (D, O)
    b_fused = (jnp.dot(b1.astype(jnp.float32), w2f,
                       preferred_element_type=jnp.float32)
               + b2.astype(jnp.float32))                                     # (O,)

    # Lane-dense padding: output dim -> multiple of 128 (unmasked full-vreg stores),
    # contraction dim -> multiple of 128 (aligned loads). Zero padding is exact.
    D_pad = _round_up(D, 128)
    O_pad = _round_up(O, 128)

    # Batch tiling: 128-row tiles (matches v5e MXU height, amortizes per-step
    # overhead) when B is large; for small demo batches use an 8-sublane granule.
    TB = batch_tile if B >= batch_tile else _round_up(B, 8)
    B_pad = _round_up(B, TB)

    x_p = jnp.zeros((B_pad, D_pad), jnp.float32).at[:B, :D].set(x)
    w_p = jnp.zeros((D_pad, O_pad), jnp.float32).at[:D, :O].set(w_fused)
    b_p = jnp.zeros((1, O_pad), jnp.float32).at[0, :O].set(b_fused)

    out_p = pl.pallas_call(
        _fused_linear_kernel,
        out_shape=jax.ShapeDtypeStruct((B_pad, O_pad), jnp.float32),
        grid=(B_pad // TB,),
        in_specs=[
            pl.BlockSpec((TB, D_pad), lambda i: (i, 0)),      # batch-tiled input
            pl.BlockSpec((D_pad, O_pad), lambda i: (0, 0)),   # fused weight (resident)
            pl.BlockSpec((1, O_pad), lambda i: (0, 0)),       # fused bias (resident)
        ],
        out_specs=pl.BlockSpec((TB, O_pad), lambda i: (i, 0)),
        compiler_params=pltpu.CompilerParams(
            # Batch tiles are independent -> shard across both TCs on v7x.
            dimension_semantics=("parallel",)),
    )(x_p, w_p, b_p)

    # Strip batch / lane padding.
    return out_p[:B, :O]


if __name__ == "__main__":
    # Small shapes consistent with the module: images (C=1, 16x16) -> D=256.
    B, C, Himg, Wimg = 8, 1, 16, 16
    input_shape = C * Himg * Wimg      # 256
    hidden_units = 32
    output_shape = 10

    key = jax.random.PRNGKey(0)
    kx, k1w, k1b, k2w, k2b = jax.random.split(key, 5)

    x = jax.random.normal(kx, (B, C, Himg, Wimg), dtype=jnp.float32)

    # Deterministic init mimicking nn.Linear (uniform +/- 1/sqrt(fan_in)).
    lim1 = 1.0 / (input_shape ** 0.5)
    w1 = jax.random.uniform(k1w, (input_shape, hidden_units),
                            minval=-lim1, maxval=lim1, dtype=jnp.float32)
    b1 = jax.random.uniform(k1b, (hidden_units,),
                            minval=-lim1, maxval=lim1, dtype=jnp.float32)
    lim2 = 1.0 / (hidden_units ** 0.5)
    w2 = jax.random.uniform(k2w, (hidden_units, output_shape),
                            minval=-lim2, maxval=lim2, dtype=jnp.float32)
    b2 = jax.random.uniform(k2b, (output_shape,),
                            minval=-lim2, maxval=lim2, dtype=jnp.float32)

    out = fashion_mnist_model_v0(x, w1, b1, w2, b2)
    out = jax.block_until_ready(out)

    # Cross-check against plain (unfused) JAX reference.
    ref = x.reshape(B, -1) @ w1 + b1
    ref = ref @ w2 + b2
    assert out.shape == (B, output_shape)
    assert jnp.allclose(out, ref, atol=1e-4, rtol=1e-4)

    print("KERNEL_OK")
</pallas_src>

<mosaic_0001>
module attributes {stable_mosaic.version = 11 : i64} {
  func.func @_fused_linear_kernel(%arg0: i32, %arg1: memref<8x256xf32, #tpu.memory_space<vmem>>, %arg2: memref<256x128xf32, #tpu.memory_space<vmem>>, %arg3: memref<1x128xf32, #tpu.memory_space<vmem>>, %arg4: memref<8x128xf32, #tpu.memory_space<vmem>>) attributes {dimension_semantics = [#tpu.dimension_semantics<parallel>], iteration_bounds = array<i64: 1>, scalar_prefetch = 0 : i64, scratch_operands = 0 : i64, tpu.core_type = #tpu.core_type<tc>, window_params = [{transform_indices = @transform_0, window_bounds = array<i64: 8, 256>}, {pipeline_mode = #tpu.pipeline_mode<synchronous>, transform_indices = @transform_1, window_bounds = array<i64: 256, 128>}, {pipeline_mode = #tpu.pipeline_mode<synchronous>, transform_indices = @transform_2, window_bounds = array<i64: 1, 128>}, {transform_indices = @transform_3, window_bounds = array<i64: 8, 128>}]} {
    %c0 = arith.constant 0 : index
    %c0_0 = arith.constant 0 : index
    %0 = vector.load %arg1[%c0, %c0_0] : memref<8x256xf32, #tpu.memory_space<vmem>>, vector<8x256xf32>
    %c0_1 = arith.constant 0 : index
    %c0_2 = arith.constant 0 : index
    %1 = vector.load %arg2[%c0_1, %c0_2] : memref<256x128xf32, #tpu.memory_space<vmem>>, vector<256x128xf32>
    %cst = arith.constant dense<0.000000e+00> : vector<8x128xf32>
    %2 = tpu.matmul %0, %1, %cst {dimension_numbers = #tpu.dot_dimension_numbers<[1], [0], [0], [1], [0, 0, 1, 1], [], []>} : vector<8x256xf32>, vector<256x128xf32>, vector<8x128xf32> -> vector<8x128xf32>
    %c0_3 = arith.constant 0 : index
    %c0_4 = arith.constant 0 : index
    %3 = vector.load %arg3[%c0_3, %c0_4] : memref<1x128xf32, #tpu.memory_space<vmem>>, vector<1x128xf32>
    %4 = vector.broadcast %3 : vector<1x128xf32> to vector<8x128xf32>
    %5 = arith.addf %2, %4 : vector<8x128xf32>
    %c0_5 = arith.constant 0 : index
    %c0_6 = arith.constant 0 : index
    %6 = vector.load %arg4[%c0_5, %c0_6] : memref<8x128xf32, #tpu.memory_space<vmem>>, vector<8x128xf32>
    tpu.vector_store %arg4[%c0_5, %c0_6], %5 {strides = array<i32>} : memref<8x128xf32, #tpu.memory_space<vmem>>, vector<8x128xf32>,
    return
  }
  func.func @transform_0(%arg0: i32) -> (i32, i32) {
    %c0_i32 = arith.constant 0 : i32
    %c0_i32_0 = arith.constant 0 : i32
    return %arg0, %c0_i32 : i32, i32
  }
  func.func @transform_1(%arg0: i32) -> (i32, i32) {
    %c0_i32 = arith.constant 0 : i32
    %c0_i32_0 = arith.constant 0 : i32
    %c0_i32_1 = arith.constant 0 : i32
    return %c0_i32, %c0_i32_0 : i32, i32
  }
  func.func @transform_2(%arg0: i32) -> (i32, i32) {
    %c0_i32 = arith.constant 0 : i32
    %c0_i32_0 = arith.constant 0 : i32
    %c0_i32_1 = arith.constant 0 : i32
    return %c0_i32, %c0_i32_0 : i32, i32
  }
  func.func @transform_3(%arg0: i32) -> (i32, i32) {
    %c0_i32 = arith.constant 0 : i32
    %c0_i32_0 = arith.constant 0 : i32
    return %arg0, %c0_i32 : i32, i32
  }
}

</mosaic_0001>

<llo_original>
// kernel: tpu_custom_call.1
$region0: #{tpu_custom_call.1}
  #allocation0 [shape = 'u32[]', space=smem, size = 0x4, offset = 0x4, fixed_abs, tag = 'smem constant byte address 0x4 - core index']
  #allocation1 [shape = 'u32[72,128]{1,0:T(1,128)}', space=vmem, size = 0x9000, scoped, tag = 'internal scratch']
  %s0 = inlined_call_operand.hbm [shape: f32[8,256], index: 0, kind: input, shape index: {}]
  %s1 = inlined_call_operand.hbm [shape: f32[256,128], index: 1, kind: input, shape index: {}]
  %s2 = inlined_call_operand.vmem [shape: f32[1,128], index: 2, kind: input, shape index: {}]
  %s3 = inlined_call_operand.hbm [shape: f32[8,128], index: 3, kind: output, shape index: {}]
  %s4 = sld [smem:[#allocation0]]
  $region30: #{tpu_custom_call.1} parent=0
    _
  %s6 = ssub.s32 1, %s4
  %s7 = scalar_select 0, %s6, %s4
  $region1: #{tpu_custom_call.1} parent=0
    #allocation2 [shape = 'u8[8192]{0}', space=vmem, size = 0x2000, scoped, tag = 'input window, operand 0, single buffered']
    #allocation3 [shape = 's32[1]{0}', space=sflag, size = 0x4, scoped, tag = 'scoped memory for tpu_custom_call.1']
    #allocation4 [shape = 's32[1]{0}', space=sflag, size = 0x4, scoped, tag = 'scoped memory for tpu_custom_call.1']
    #allocation5 [shape = 'u8[131072]{0}', space=vmem, size = 0x20000, scoped, tag = 'input window, operand 1, single buffered']
    #allocation6 [shape = 's32[1]{0}', space=sflag, size = 0x4, scoped, tag = 'scoped memory for tpu_custom_call.1']
    #allocation7 [shape = 'u8[4096]{0}', space=vmem, size = 0x1000, scoped, tag = 'output window, operand 0, single buffered']
    %8 = vsyncpa [#allocation3], 0
    %9 = vsyncpa [#allocation6], 0
    %10 = vsyncpa [#allocation4], 0
    // Predicated region
    $region2: #{tpu_custom_call.1} parent=1 // pred_check
      _
    $region3: #{tpu_custom_call.1} parent=1 // pred_check_branch
      %12 = sbr.rel (0) target = $region5
    $region4: #{tpu_custom_call.1} parent=1 // pred_region
      %14 = vsyncadd [#allocation3], 0
      %s16 = sshll.u32 %s0, 4
      %s17 = int_to_ptr.hbm [resolvable:$true] %s16
      %s18 = sshll.u32 [#allocation2], 4
      %s19 = int_to_ptr.vmem [resolvable:$true] %s18
      %21 = dma.hbm_to_vmem [thread:$0]  %s17, 256, %s19, [#allocation3]
    $region5: #{tpu_custom_call.1} parent=1 // pred_fallthru
      _
    // Predicated region
    $region6: #{tpu_custom_call.1} parent=1 // pred_check
      _
    $region7: #{tpu_custom_call.1} parent=1 // pred_check_branch
      %23 = sbr.rel (0) target = $region9
    $region8: #{tpu_custom_call.1} parent=1 // pred_region
      %25 = vsyncadd [#allocation6], 0
      %s26 = sshll.u32 %s1, 4
      %s27 = int_to_ptr.hbm [resolvable:$true] %s26
      %s28 = sshll.u32 [#allocation5], 4
      %s29 = int_to_ptr.vmem [resolvable:$true] %s28
      %34 = dma.hbm_to_vmem [thread:$0]  %s27, 4096, %s29, [#allocation6], 128, 128, 8
    $region9: #{tpu_custom_call.1} parent=1 // pred_fallthru
      _
    // Predicated region
    $region10: #{tpu_custom_call.1} parent=1 // pred_check
      _
    $region11: #{tpu_custom_call.1} parent=1 // pred_check_branch
      %36 = sbr.rel (0) target = $region13
    $region12: #{tpu_custom_call.1} parent=1 // pred_region
      _
    $region13: #{tpu_custom_call.1} parent=1 // pred_fallthru
      _
    // Predicated region
    $region14: #{tpu_custom_call.1} parent=1 // pred_check
      _
    $region15: #{tpu_custom_call.1} parent=1 // pred_check_branch
      %38 = sbr.rel (0) target = $region17
    $region16: #{tpu_custom_call.1} parent=1 // pred_region
      %40 = dma.done [#allocation3], 256
    $region17: #{tpu_custom_call.1} parent=1 // pred_fallthru
      _
    // Predicated region
    $region18: #{tpu_custom_call.1} parent=1 // pred_check
      _
    $region19: #{tpu_custom_call.1} parent=1 // pred_check_branch
      %42 = sbr.rel (0) target = $region21
    $region20: #{tpu_custom_call.1} parent=1 // pred_region
      %44 = dma.done [#allocation6], 4096
    $region21: #{tpu_custom_call.1} parent=1 // pred_fallthru
      _
    %v45 = vld [vmem:[#allocation2] sm:$0xff]
    %v46 = vld [vmem:[#allocation2 + $0x8] sm:$0xff]
    %v47 = vld [vmem:[#allocation5] sm:$0xff]
    %v48 = vld [vmem:[#allocation5 + $0x8] sm:$0xff]
    %v49 = vld [vmem:[#allocation5 + $0x10] sm:$0xff]
    %v50 = vld [vmem:[#allocation5 + $0x18] sm:$0xff]
    %v51 = vld [vmem:[#allocation5 + $0x20] sm:$0xff]
    %v52 = vld [vmem:[#allocation5 + $0x28] sm:$0xff]
    %v53 = vld [vmem:[#allocation5 + $0x30] sm:$0xff]
    %v54 = vld [vmem:[#allocation5 + $0x38] sm:$0xff]
    %v55 = vld [vmem:[#allocation5 + $0x40] sm:$0xff]
    %v56 = vld [vmem:[#allocation5 + $0x48] sm:$0xff]
    %v57 = vld [vmem:[#allocation5 + $0x50] sm:$0xff]
    %v58 = vld [vmem:[#allocation5 + $0x58] sm:$0xff]
    %v59 = vld [vmem:[#allocation5 + $0x60] sm:$0xff]
    %v60 = vld [vmem:[#allocation5 + $0x68] sm:$0xff]
    %v61 = vld [vmem:[#allocation5 + $0x70] sm:$0xff]
    %v62 = vld [vmem:[#allocation5 + $0x78] sm:$0xff]
    %v63 = vld [vmem:[#allocation5 + $0x80] sm:$0xff]
    %v64 = vld [vmem:[#allocation5 + $0x88] sm:$0xff]
    %v65 = vld [vmem:[#allocation5 + $0x90] sm:$0xff]
    %v66 = vld [vmem:[#allocation5 + $0x98] sm:$0xff]
    %v67 = vld [vmem:[#allocation5 + $0xa0] sm:$0xff]
    %v68 = vld [vmem:[#allocation5 + $0xa8] sm:$0xff]
    %v69 = vld [vmem:[#allocation5 + $0xb0] sm:$0xff]
    %v70 = vld [vmem:[#allocation5 + $0xb8] sm:$0xff]
    %v71 = vld [vmem:[#allocation5 + $0xc0] sm:$0xff]
    %v72 = vld [vmem:[#allocation5 + $0xc8] sm:$0xff]
    %v73 = vld [vmem:[#allocation5 + $0xd0] sm:$0xff]
    %v74 = vld [vmem:[#allocation5 + $0xd8] sm:$0xff]
    %v75 = vld [vmem:[#allocation5 + $0xe0] sm:$0xff]
    %v76 = vld [vmem:[#allocation5 + $0xe8] sm:$0xff]
    %v77 = vld [vmem:[#allocation5 + $0xf0] sm:$0xff]
    %v78 = vld [vmem:[#allocation5 + $0xf8] sm:$0xff]
    %v79 = vld [vmem:[%s2] sm:$0x1]
    %v81 = vperm.slane %v79, 0
    %83 = vmatpush.msra.mxu0 %v62
    %84 = vmatpush.msra.mxu0 %v61
    %85 = vmatpush.msra.mxu0 %v60
    %86 = vmatpush.msra.mxu0 %v59
    %87 = vmatpush.msra.mxu0 %v58
    %88 = vmatpush.msra.mxu0 %v57
    %89 = vmatpush.msra.mxu0 %v56
    %90 = vmatpush.msra.mxu0 %v55
    %91 = vmatpush.msra.mxu0 %v54
    %92 = vmatpush.msra.mxu0 %v53
    %93 = vmatpush.msra.mxu0 %v52
    %94 = vmatpush.msra.mxu0 %v51
    %95 = vmatpush.msra.mxu0 %v50
    %96 = vmatpush.msra.mxu0 %v49
    %97 = vmatpush.msra.mxu0 %v48
    %98 = vmatpush.msra.mxu0 %v47
    %99 = vmatmul.f32.gmra.mxu0 %v45
    %v100 = vpop.f32.mrf.mxu0
    %v101 = vadd.f32 %v81, %v100
    %102 = vdwg.mxu0
    %103 = vmatpush.msra.mxu0 %v78
    %104 = vmatpush.msra.mxu0 %v77
    %105 = vmatpush.msra.mxu0 %v76
    %106 = vmatpush.msra.mxu0 %v75
    %107 = vmatpush.msra.mxu0 %v74
    %108 = vmatpush.msra.mxu0 %v73
    %109 = vmatpush.msra.mxu0 %v72
    %110 = vmatpush.msra.mxu0 %v71
    %111 = vmatpush.msra.mxu0 %v70
    %112 = vmatpush.msra.mxu0 %v69
    %113 = vmatpush.msra.mxu0 %v68
    %114 = vmatpush.msra.mxu0 %v67
    %115 = vmatpush.msra.mxu0 %v66
    %116 = vmatpush.msra.mxu0 %v65
    %117 = vmatpush.msra.mxu0 %v64
    %118 = vmatpush.msra.mxu0 %v63
    %119 = vmatmul.f32.gmra.mxu0 %v46
    %v120 = vpop.f32.mrf.mxu0
    %v121 = vadd.f32 %v101, %v120
    %122 = vdwg.mxu0
    %123 = vst [vmem:[#allocation7] sm:$0xff] %v121
    // Predicated region
    $region22: #{tpu_custom_call.1} parent=1 // pred_check
      _
    $region23: #{tpu_custom_call.1} parent=1 // pred_check_branch
      %125 = sbr.rel (0) target = $region25
    $region24: #{tpu_custom_call.1} parent=1 // pred_region
      %127 = vsyncadd [#allocation4], 0
      %s129 = sshll.u32 [#allocation7], 4
      %s130 = int_to_ptr.vmem [resolvable:$true] %s129
      %s131 = sshll.u32 %s3, 4
      %s132 = int_to_ptr.hbm [resolvable:$true] %s131
      %134 = dma.vmem_to_hbm [thread:$0]  %s130, 128, %s132, [#allocation4]
    $region25: #{tpu_custom_call.1} parent=1 // pred_fallthru
      _
    // Predicated region
    $region26: #{tpu_custom_call.1} parent=1 // pred_check
      _
    $region27: #{tpu_custom_call.1} parent=1 // pred_check_branch
      %136 = sbr.rel (0) target = $region29
    $region28: #{tpu_custom_call.1} parent=1 // pred_region
      %138 = dma.done [#allocation4], 128
    $region29: #{tpu_custom_call.1} parent=1 // pred_fallthru
      _
    %139 = vsyncpa [#allocation3], 1
    %140 = vsyncpa [#allocation6], 1
    %141 = vsyncpa [#allocation4], 1

</llo_original>
